<compile_context>
chip_gen: v7x
topology: tpu7x:2x2x1
jax: 0.10.0
libtpu: 0.0.40
codegen_flags: <defaults>
</compile_context>

<pallas_src>
import functools
import math

import numpy as np
import jax
import jax.numpy as jnp
from jax.experimental import pallas as pl
from jax.experimental.pallas import tpu as pltpu


# --------------------------------------------------------------------------- #
# Kernel
# --------------------------------------------------------------------------- #
def _particul_kernel(m_loc_ref, m_cls_ref, x_ref, out_ref, *, P):
    """One batch tile per grid step.

    m_loc_ref : (HW, HW) 0/1 matrix = k x k 'same'-padded box filter over the flat map
    m_cls_ref : (HW, HW) 0/1 matrix = 3 x 3 'same'-padded box filter over the flat map
    x_ref     : (bt*P, HW) activation maps, one flattened (H*W) map per row; the
                P maps of one image occupy P consecutive rows (native dtype).
    out_ref   : (bt*P, 3) f32 = [locality rowmax, unicity rowmax, clustering rowmax]
                (columns 1 and 2 are only meaningful on rows r with r % P == P-1).
    """
    x = x_ref[...]                                   # native dtype, no f32 copy
    m_loc = m_loc_ref[...]
    m_cls = m_cls_ref[...]

    # LocalityLoss conv: full k x k zero-padded box as ONE MXU matmul per row.
    loc = jnp.dot(x, m_loc, preferred_element_type=jnp.float32)       # (R, HW) f32
    l_row = jnp.max(loc, axis=-1, keepdims=True)                      # (R, 1)

    # ClusteringLoss conv on S = sum_p x_p:  F = 2*S - box3(S).
    # By linearity F = sum_p (2*x_p - box3(x_p)) -> apply per row, group-sum after.
    nb = jnp.dot(x, m_cls, preferred_element_type=jnp.float32)        # (R, HW) f32
    g = 2.0 * x - nb                                                  # f32 (promotes)

    # Cross-pattern group sums: row b*P + (P-1) accumulates the P rows of image b.
    # (Other rows hold unused mixtures and are ignored by the wrapper.)
    acc_s = x
    acc_f = g
    for d in range(1, P):
        acc_s = acc_s + pltpu.roll(x, shift=d, axis=0)
        acc_f = acc_f + pltpu.roll(g, shift=d, axis=0)

    s_row = jnp.max(acc_s, axis=-1, keepdims=True).astype(jnp.float32)  # (R, 1)
    f_row = jnp.max(acc_f, axis=-1, keepdims=True)                       # (R, 1)

    out_ref[...] = jnp.concatenate([l_row, s_row, f_row], axis=-1)       # (R, 3)


# --------------------------------------------------------------------------- #
# Hardware queries (safe fallbacks so the wrapper never crashes)
# --------------------------------------------------------------------------- #
def _tpu_info():
    try:
        return pltpu.get_tpu_info()
    except Exception:
        return None


def _vmem_capacity_bytes():
    info = _tpu_info()
    v = getattr(info, "vmem_capacity_bytes", None) if info is not None else None
    return int(v) if v else (64 << 20)          # conservative default (v7x size)


def _num_tensorcores():
    info = _tpu_info()
    if info is not None:
        for name in ("num_cores", "tensorcore_count", "core_count"):
            v = getattr(info, name, None)
            if v:
                try:
                    return max(1, int(v))
                except Exception:
                    pass
    return 1


# --------------------------------------------------------------------------- #
# Wrapper
# --------------------------------------------------------------------------- #
def particul_vmax_pallas(output, loc_ksize, *, block_images=None):
    """Per-image maxima for the three Particul losses.

    Returns (l_vmax (B, P), u_vmax (B,), c_vmax (B,)).
    """
    B, P, H, W = output.shape
    if loc_ksize % 2 != 1:
        # TODO(synk): even loc_ksize needs PyTorch's asymmetric 'same' padding.
        raise NotImplementedError("loc_ksize must be odd")
    half = loc_ksize // 2
    HW = H * W
    dtype = output.dtype
    esize = np.dtype(dtype).itemsize

    # Free reshape (contiguous dims merge) — no HBM relayout pass.
    x2d = output.reshape(B * P, HW)

    # 0/1 'same'-padded box-filter matrices over the flattened (H, W) map.
    # TODO(synk): O(HW^2) constants / O(HW) MACs per element; for very large maps
    # a separable (roll-based) formulation would be preferable.
    hi = np.repeat(np.arange(H), W)
    wi = np.tile(np.arange(W), H)
    dh = np.abs(hi[:, None] - hi[None, :])
    dw = np.abs(wi[:, None] - wi[None, :])
    m_loc = ((dh <= half) & (dw <= half)).astype(np.float32)   # k x k box
    m_cls = ((dh <= 1) & (dw <= 1)).astype(np.float32)          # 3 x 3 box

    # ---- tile sizing ----------------------------------------------------- #
    g = 8 // math.gcd(P, 8)                    # images/block so rows % 8 == 0

    def _align(n):
        return max(g, (int(n) // g) * g)

    img_bytes = P * HW * esize
    phys_vmem = _vmem_capacity_bytes()
    vmem_budget = (phys_vmem * 3) // 4         # headroom for compiler scratch

    if block_images is None:
        bt = max(1, (4 << 20) // max(img_bytes, 1))     # ~4 MiB input per step
        ncores = _num_tensorcores()
        if ncores > 1 and B >= 2 * ncores:              # only split on multi-TC parts
            bt = min(bt, -(-B // (2 * ncores)))         # >= 2 steps per TensorCore
    else:
        bt = block_images
    bt = _align(min(max(int(bt), 1), max(B, 1)))

    def _footprint(b):
        rows = b * P
        return (2 * rows * HW * esize           # double-buffered input block
                + 2 * 2 * HW * HW * esize       # the two constant matrices
                + 5 * rows * HW * 4             # f32 intermediates (loc/nb/g/accs)
                + (2 << 20))

    while _footprint(bt) > vmem_budget and bt > g:
        bt = _align(bt // 2)

    grid_b = -(-B // bt)
    B_pad = grid_b * bt
    if B_pad > B:
        x2d = jnp.pad(x2d, ((0, (B_pad - B) * P), (0, 0)))

    kernel = functools.partial(_particul_kernel, P=P)
    out = pl.pallas_call(
        kernel,
        out_shape=jax.ShapeDtypeStruct((B_pad * P, 3), jnp.float32),
        grid_spec=pltpu.PrefetchScalarGridSpec(
            num_scalar_prefetch=0,
            grid=(grid_b,),
            in_specs=[
                pl.BlockSpec((HW, HW), lambda b: (0, 0)),
                pl.BlockSpec((HW, HW), lambda b: (0, 0)),
                pl.BlockSpec((bt * P, HW), lambda b: (b, 0)),
            ],
            out_specs=pl.BlockSpec((bt * P, 3), lambda b: (b, 0)),
        ),
        compiler_params=pltpu.CompilerParams(
            dimension_semantics=("parallel",),
            vmem_limit_bytes=int(vmem_budget),
        ),
    )(jnp.asarray(m_loc, dtype=dtype), jnp.asarray(m_cls, dtype=dtype), x2d)

    res = out[: B * P].reshape(B, P, 3)
    l_vmax = res[:, :, 0]          # (B, P)
    u_vmax = res[:, P - 1, 1]      # (B,)  (row P-1 of each image holds the group sums)
    c_vmax = res[:, P - 1, 2]      # (B,)
    return l_vmax, u_vmax, c_vmax


def particul_loss(output, *, loc_ksize, unq_ratio, unq_thres, cls_ratio, cls_thres):
    """Equivalent of ParticulLoss.forward (labels are ignored)."""
    l_vmax, u_vmax, c_vmax = particul_vmax_pallas(output, loc_ksize)
    # Scalar-sized glue reductions in plain JAX, matching PyTorch semantics.
    l_loss = -jnp.mean(l_vmax, axis=0)                                 # (P,)
    u_loss = jnp.mean(jax.nn.relu(u_vmax - unq_thres))                 # scalar
    c_loss = jnp.mean(jax.nn.relu(c_vmax - cls_thres))                 # scalar
    loss = jnp.mean(l_loss) + unq_ratio * u_loss + cls_ratio * c_loss
    return loss, l_loss, u_loss, c_loss


# --------------------------------------------------------------------------- #
# Pure-JAX reference for validation
# --------------------------------------------------------------------------- #
def particul_loss_reference(output, *, loc_ksize, unq_ratio, unq_thres, cls_ratio, cls_thres):
    output = output.astype(jnp.float32)
    B, P, H, W = output.shape
    half = loc_ksize // 2
    pad = jnp.pad(output, ((0, 0), (0, 0), (half, half), (half, half)))
    loc = jnp.zeros_like(output)
    for dy in range(loc_ksize):
        for dx in range(loc_ksize):
            loc = loc + pad[:, :, dy:dy + H, dx:dx + W]
    l_vmax = jnp.max(loc, axis=(2, 3))                                 # (B, P)

    S = jnp.sum(output, axis=1)                                        # (B, H, W)
    u_vmax = jnp.max(S, axis=(1, 2))                                   # (B,)

    Sp = jnp.pad(S, ((0, 0), (1, 1), (1, 1)))
    nb = jnp.zeros_like(S)
    for dy in range(3):
        for dx in range(3):
            nb = nb + Sp[:, dy:dy + H, dx:dx + W]
    F = 2.0 * S - nb
    c_vmax = jnp.max(F, axis=(1, 2))                                   # (B,)

    l_loss = -jnp.mean(l_vmax, axis=0)
    u_loss = jnp.mean(jax.nn.relu(u_vmax - unq_thres))
    c_loss = jnp.mean(jax.nn.relu(c_vmax - cls_thres))
    loss = jnp.mean(l_loss) + unq_ratio * u_loss + cls_ratio * c_loss
    return loss, l_loss, u_loss, c_loss


if __name__ == "__main__":
    # Small shapes consistent with ParticulLoss: B=2 images, P=4 pattern detectors,
    # 16x16 activation maps.
    B, P, H, W = 2, 4, 16, 16
    loc_ksize = 3
    unq_ratio, unq_thres = 1.0, 1.0
    cls_ratio, cls_thres = 0.5, 0.0

    key = jax.random.PRNGKey(0)
    output = jax.random.normal(key, (B, P, H, W), dtype=jnp.float32)

    loss, l_loss, u_loss, c_loss = particul_loss(
        output, loc_ksize=loc_ksize,
        unq_ratio=unq_ratio, unq_thres=unq_thres,
        cls_ratio=cls_ratio, cls_thres=cls_thres)
    jax.block_until_ready(loss)

    # Metrics list, mirroring the PyTorch forward's return value.
    metrics = [float(loss), float(jnp.mean(l_loss)), float(u_loss), float(c_loss)]
    metrics += [float(v) for v in l_loss]

    # Validate against a pure-JAX reference. (MXU default precision with 0/1 RHS
    # keeps the error well below this tolerance; see notes.)
    ref_loss, ref_l, ref_u, ref_c = particul_loss_reference(
        output, loc_ksize=loc_ksize,
        unq_ratio=unq_ratio, unq_thres=unq_thres,
        cls_ratio=cls_ratio, cls_thres=cls_thres)
    assert jnp.allclose(loss, ref_loss, rtol=1e-3, atol=1e-3), (loss, ref_loss)
    assert jnp.allclose(l_loss, ref_l, rtol=1e-3, atol=1e-3)
    assert jnp.allclose(u_loss, ref_u, rtol=1e-3, atol=1e-3)
    assert jnp.allclose(c_loss, ref_c, rtol=1e-3, atol=1e-3)

    print("KERNEL_OK")
</pallas_src>

<mosaic_0001>
module attributes {stable_mosaic.version = 11 : i64} {
  func.func @_particul_kernel(%arg0: i32, %arg1: memref<256x256xf32, #tpu.memory_space<vmem>>, %arg2: memref<256x256xf32, #tpu.memory_space<vmem>>, %arg3: memref<8x256xf32, #tpu.memory_space<vmem>>, %arg4: memref<8x3xf32, #tpu.memory_space<vmem>>) attributes {dimension_semantics = [#tpu.dimension_semantics<parallel>], iteration_bounds = array<i64: 1>, scalar_prefetch = 0 : i64, scratch_operands = 0 : i64, tpu.core_type = #tpu.core_type<tc>, window_params = [{pipeline_mode = #tpu.pipeline_mode<synchronous>, transform_indices = @transform_0, window_bounds = array<i64: 256, 256>}, {pipeline_mode = #tpu.pipeline_mode<synchronous>, transform_indices = @transform_1, window_bounds = array<i64: 256, 256>}, {transform_indices = @transform_2, window_bounds = array<i64: 8, 256>}, {transform_indices = @transform_3, window_bounds = array<i64: 8, 3>}]} {
    %c0 = arith.constant 0 : index
    %c0_0 = arith.constant 0 : index
    %0 = vector.load %arg3[%c0, %c0_0] : memref<8x256xf32, #tpu.memory_space<vmem>>, vector<8x256xf32>
    %c0_1 = arith.constant 0 : index
    %c0_2 = arith.constant 0 : index
    %1 = vector.load %arg1[%c0_1, %c0_2] : memref<256x256xf32, #tpu.memory_space<vmem>>, vector<256x256xf32>
    %c0_3 = arith.constant 0 : index
    %c0_4 = arith.constant 0 : index
    %2 = vector.load %arg2[%c0_3, %c0_4] : memref<256x256xf32, #tpu.memory_space<vmem>>, vector<256x256xf32>
    %cst = arith.constant dense<0.000000e+00> : vector<8x256xf32>
    %3 = tpu.matmul %0, %1, %cst {dimension_numbers = #tpu.dot_dimension_numbers<[1], [0], [0], [1], [0, 0, 1, 1], [], []>} : vector<8x256xf32>, vector<256x256xf32>, vector<8x256xf32> -> vector<8x256xf32>
    %cst_5 = arith.constant dense<0xFF800000> : vector<8xf32>
    %4 = vector.multi_reduction <maximumf>, %3, %cst_5 [1] : vector<8x256xf32> to vector<8xf32>
    %5 = vector.shape_cast %4 : vector<8xf32> to vector<8x1xf32>
    %cst_6 = arith.constant dense<0.000000e+00> : vector<8x256xf32>
    %6 = tpu.matmul %0, %2, %cst_6 {dimension_numbers = #tpu.dot_dimension_numbers<[1], [0], [0], [1], [0, 0, 1, 1], [], []>} : vector<8x256xf32>, vector<256x256xf32>, vector<8x256xf32> -> vector<8x256xf32>
    %cst_7 = arith.constant 2.000000e+00 : f32
    %7 = vector.broadcast %cst_7 : f32 to vector<8x256xf32>
    %8 = arith.mulf %7, %0 : vector<8x256xf32>
    %9 = arith.subf %8, %6 : vector<8x256xf32>
    %c1_i32 = arith.constant 1 : i32
    %10 = tpu.dynamic_rotate %0 by %c1_i32 dim 0 : vector<8x256xf32>, i32 -> vector<8x256xf32>
    %11 = arith.addf %0, %10 : vector<8x256xf32>
    %c1_i32_8 = arith.constant 1 : i32
    %12 = tpu.dynamic_rotate %9 by %c1_i32_8 dim 0 : vector<8x256xf32>, i32 -> vector<8x256xf32>
    %13 = arith.addf %9, %12 : vector<8x256xf32>
    %c2_i32 = arith.constant 2 : i32
    %14 = tpu.dynamic_rotate %0 by %c2_i32 dim 0 : vector<8x256xf32>, i32 -> vector<8x256xf32>
    %15 = arith.addf %11, %14 : vector<8x256xf32>
    %c2_i32_9 = arith.constant 2 : i32
    %16 = tpu.dynamic_rotate %9 by %c2_i32_9 dim 0 : vector<8x256xf32>, i32 -> vector<8x256xf32>
    %17 = arith.addf %13, %16 : vector<8x256xf32>
    %c3_i32 = arith.constant 3 : i32
    %18 = tpu.dynamic_rotate %0 by %c3_i32 dim 0 : vector<8x256xf32>, i32 -> vector<8x256xf32>
    %19 = arith.addf %15, %18 : vector<8x256xf32>
    %c3_i32_10 = arith.constant 3 : i32
    %20 = tpu.dynamic_rotate %9 by %c3_i32_10 dim 0 : vector<8x256xf32>, i32 -> vector<8x256xf32>
    %21 = arith.addf %17, %20 : vector<8x256xf32>
    %cst_11 = arith.constant dense<0xFF800000> : vector<8xf32>
    %22 = vector.multi_reduction <maximumf>, %19, %cst_11 [1] : vector<8x256xf32> to vector<8xf32>
    %23 = vector.shape_cast %22 : vector<8xf32> to vector<8x1xf32>
    %cst_12 = arith.constant dense<0xFF800000> : vector<8xf32>
    %24 = vector.multi_reduction <maximumf>, %21, %cst_12 [1] : vector<8x256xf32> to vector<8xf32>
    %25 = vector.shape_cast %24 : vector<8xf32> to vector<8x1xf32>
    %26 = tpu.concatenate %5, %23, %25 in 1 : vector<8x1xf32>, vector<8x1xf32>, vector<8x1xf32> -> vector<8x3xf32>
    %c0_13 = arith.constant 0 : index
    %c0_14 = arith.constant 0 : index
    %27 = vector.load %arg4[%c0_13, %c0_14] : memref<8x3xf32, #tpu.memory_space<vmem>>, vector<8x3xf32>
    tpu.vector_store %arg4[%c0_13, %c0_14], %26 {strides = array<i32>} : memref<8x3xf32, #tpu.memory_space<vmem>>, vector<8x3xf32>,
    return
  }
  func.func @transform_0(%arg0: i32) -> (i32, i32) {
    %c0_i32 = arith.constant 0 : i32
    %c0_i32_0 = arith.constant 0 : i32
    %c0_i32_1 = arith.constant 0 : i32
    return %c0_i32, %c0_i32_0 : i32, i32
  }
  func.func @transform_1(%arg0: i32) -> (i32, i32) {
    %c0_i32 = arith.constant 0 : i32
    %c0_i32_0 = arith.constant 0 : i32
    %c0_i32_1 = arith.constant 0 : i32
    return %c0_i32, %c0_i32_0 : i32, i32
  }
  func.func @transform_2(%arg0: i32) -> (i32, i32) {
    %c0_i32 = arith.constant 0 : i32
    %c0_i32_0 = arith.constant 0 : i32
    return %arg0, %c0_i32 : i32, i32
  }
  func.func @transform_3(%arg0: i32) -> (i32, i32) {
    %c0_i32 = arith.constant 0 : i32
    %c0_i32_0 = arith.constant 0 : i32
    return %arg0, %c0_i32 : i32, i32
  }
}

</mosaic_0001>

<llo_original>
// kernel: tpu_custom_call.1
$region0: #{tpu_custom_call.1}
  #allocation0 [shape = 'u32[]', space=smem, size = 0x4, offset = 0x4, fixed_abs, tag = 'smem constant byte address 0x4 - core index']
  #allocation1 [shape = 'u32[144,128]{1,0:T(1,128)}', space=vmem, size = 0x12000, scoped, tag = 'internal scratch']
  %s0 = inlined_call_operand.hbm [shape: f32[256,256], index: 0, kind: input, shape index: {}]
  %s1 = inlined_call_operand.hbm [shape: f32[256,256], index: 1, kind: input, shape index: {}]
  %s2 = inlined_call_operand.hbm [shape: f32[8,256], index: 2, kind: input, shape index: {}]
  %s3 = inlined_call_operand.vmem [shape: f32[8,3], index: 3, kind: output, shape index: {}]
  %s4 = sld [smem:[#allocation0]]
  $region34: #{tpu_custom_call.1} parent=0
    _
  %s6 = ssub.s32 1, %s4
  %s7 = scalar_select 0, %s6, %s4
  $region1: #{tpu_custom_call.1} parent=0
    #allocation2 [shape = 'u8[262144]{0}', space=vmem, size = 0x40000, scoped, tag = 'input window, operand 0, single buffered']
    #allocation3 [shape = 's32[1]{0}', space=sflag, size = 0x4, scoped, tag = 'scoped memory for tpu_custom_call.1']
    #allocation4 [shape = 'u8[262144]{0}', space=vmem, size = 0x40000, scoped, tag = 'input window, operand 1, single buffered']
    #allocation5 [shape = 's32[1]{0}', space=sflag, size = 0x4, scoped, tag = 'scoped memory for tpu_custom_call.1']
    #allocation6 [shape = 'u8[8192]{0}', space=vmem, size = 0x2000, scoped, tag = 'input window, operand 2, single buffered']
    %8 = vsyncpa [#allocation3], 0
    %9 = vsyncpa [#allocation5], 0
    // Predicated region
    $region2: #{tpu_custom_call.1} parent=1 // pred_check
      _
    $region3: #{tpu_custom_call.1} parent=1 // pred_check_branch
      %11 = sbr.rel (0) target = $region5
    $region4: #{tpu_custom_call.1} parent=1 // pred_region
      %s13 = ssub.s32 8192, 8192
      %14 = vsyncadd [#allocation3], %s13
      %s15 = sshll.u32 [#allocation2], 4
      %s16 = int_to_ptr.vmem [resolvable:$true] %s15
      %21 = dma.hbm_to_vmem [thread:$0]  %s0, 8192, %s16, [#allocation3], 256, 256, 16
    $region5: #{tpu_custom_call.1} parent=1 // pred_fallthru
      _
    // Predicated region
    $region6: #{tpu_custom_call.1} parent=1 // pred_check
      _
    $region7: #{tpu_custom_call.1} parent=1 // pred_check_branch
      %23 = sbr.rel (0) target = $region9
    $region8: #{tpu_custom_call.1} parent=1 // pred_region
      %s25 = ssub.s32 8192, 8192
      %26 = vsyncadd [#allocation5], %s25
      %s27 = sshll.u32 [#allocation4], 4
      %s28 = int_to_ptr.vmem [resolvable:$true] %s27
      %33 = dma.hbm_to_vmem [thread:$0]  %s1, 8192, %s28, [#allocation5], 256, 256, 16
    $region9: #{tpu_custom_call.1} parent=1 // pred_fallthru
      _
    // Predicated region
    $region10: #{tpu_custom_call.1} parent=1 // pred_check
      _
    $region11: #{tpu_custom_call.1} parent=1 // pred_check_branch
      %35 = sbr.rel (0) target = $region13
    $region12: #{tpu_custom_call.1} parent=1 // pred_region
      %s37 = ssub.s32 256, 256
      %38 = vsyncadd [#allocation5], %s37
      %s40 = sshll.u32 [#allocation6], 4
      %s41 = int_to_ptr.vmem [resolvable:$true] %s40
      %43 = dma.hbm_to_vmem [thread:$0]  %s2, 256, %s41, [#allocation5]
    $region13: #{tpu_custom_call.1} parent=1 // pred_fallthru
      _
    // Predicated region
    $region14: #{tpu_custom_call.1} parent=1 // pred_check
      _
    $region15: #{tpu_custom_call.1} parent=1 // pred_check_branch
      %45 = sbr.rel (0) target = $region17
    $region16: #{tpu_custom_call.1} parent=1 // pred_region
      %46 = dma.done [#allocation3], 8192
    $region17: #{tpu_custom_call.1} parent=1 // pred_fallthru
      _
    // Predicated region
    $region18: #{tpu_custom_call.1} parent=1 // pred_check
      _
    $region19: #{tpu_custom_call.1} parent=1 // pred_check_branch
      %48 = sbr.rel (0) target = $region21
    $region20: #{tpu_custom_call.1} parent=1 // pred_region
      %49 = dma.done [#allocation5], 8192
    $region21: #{tpu_custom_call.1} parent=1 // pred_fallthru
      _
    // Predicated region
    $region22: #{tpu_custom_call.1} parent=1 // pred_check
      _
    $region23: #{tpu_custom_call.1} parent=1 // pred_check_branch
      %51 = sbr.rel (0) target = $region25
    $region24: #{tpu_custom_call.1} parent=1 // pred_region
      %52 = dma.done [#allocation5], 256
    $region25: #{tpu_custom_call.1} parent=1 // pred_fallthru
      _
    %v53 = vld [vmem:[#allocation6] sm:$0xff]
    %v54 = vld [vmem:[#allocation6 + $0x8] sm:$0xff]
    %v55 = vld [vmem:[#allocation2] sm:$0xff]
    %v56 = vld [vmem:[#allocation2 + $0x8] sm:$0xff]
    %v57 = vld [vmem:[#allocation2 + $0x10] sm:$0xff]
    %v58 = vld [vmem:[#allocation2 + $0x18] sm:$0xff]
    %v59 = vld [vmem:[#allocation2 + $0x20] sm:$0xff]
    %v60 = vld [vmem:[#allocation2 + $0x28] sm:$0xff]
    %v61 = vld [vmem:[#allocation2 + $0x30] sm:$0xff]
    %v62 = vld [vmem:[#allocation2 + $0x38] sm:$0xff]
    %v63 = vld [vmem:[#allocation2 + $0x40] sm:$0xff]
    %v64 = vld [vmem:[#allocation2 + $0x48] sm:$0xff]
    %v65 = vld [vmem:[#allocation2 + $0x50] sm:$0xff]
    %v66 = vld [vmem:[#allocation2 + $0x58] sm:$0xff]
    %v67 = vld [vmem:[#allocation2 + $0x60] sm:$0xff]
    %v68 = vld [vmem:[#allocation2 + $0x68] sm:$0xff]
    %v69 = vld [vmem:[#allocation2 + $0x70] sm:$0xff]
    %v70 = vld [vmem:[#allocation2 + $0x78] sm:$0xff]
    %v71 = vld [vmem:[#allocation2 + $0x80] sm:$0xff]
    %v72 = vld [vmem:[#allocation2 + $0x88] sm:$0xff]
    %v73 = vld [vmem:[#allocation2 + $0x90] sm:$0xff]
    %v74 = vld [vmem:[#allocation2 + $0x98] sm:$0xff]
    %v75 = vld [vmem:[#allocation2 + $0xa0] sm:$0xff]
    %v76 = vld [vmem:[#allocation2 + $0xa8] sm:$0xff]
    %v77 = vld [vmem:[#allocation2 + $0xb0] sm:$0xff]
    %v78 = vld [vmem:[#allocation2 + $0xb8] sm:$0xff]
    %v79 = vld [vmem:[#allocation2 + $0xc0] sm:$0xff]
    %v80 = vld [vmem:[#allocation2 + $0xc8] sm:$0xff]
    %v81 = vld [vmem:[#allocation2 + $0xd0] sm:$0xff]
    %v82 = vld [vmem:[#allocation2 + $0xd8] sm:$0xff]
    %v83 = vld [vmem:[#allocation2 + $0xe0] sm:$0xff]
    %v84 = vld [vmem:[#allocation2 + $0xe8] sm:$0xff]
    %v85 = vld [vmem:[#allocation2 + $0xf0] sm:$0xff]
    %v86 = vld [vmem:[#allocation2 + $0xf8] sm:$0xff]
    %v87 = vld [vmem:[#allocation2 + $0x100] sm:$0xff]
    %v88 = vld [vmem:[#allocation2 + $0x108] sm:$0xff]
    %v89 = vld [vmem:[#allocation2 + $0x110] sm:$0xff]
    %v90 = vld [vmem:[#allocation2 + $0x118] sm:$0xff]
    %v91 = vld [vmem:[#allocation2 + $0x120] sm:$0xff]
    %v92 = vld [vmem:[#allocation2 + $0x128] sm:$0xff]
    %v93 = vld [vmem:[#allocation2 + $0x130] sm:$0xff]
    %v94 = vld [vmem:[#allocation2 + $0x138] sm:$0xff]
    %v95 = vld [vmem:[#allocation2 + $0x140] sm:$0xff]
    %v96 = vld [vmem:[#allocation2 + $0x148] sm:$0xff]
    %v97 = vld [vmem:[#allocation2 + $0x150] sm:$0xff]
    %v98 = vld [vmem:[#allocation2 + $0x158] sm:$0xff]
    %v99 = vld [vmem:[#allocation2 + $0x160] sm:$0xff]
    %v100 = vld [vmem:[#allocation2 + $0x168] sm:$0xff]
    %v101 = vld [vmem:[#allocation2 + $0x170] sm:$0xff]
    %v102 = vld [vmem:[#allocation2 + $0x178] sm:$0xff]
    %v103 = vld [vmem:[#allocation2 + $0x180] sm:$0xff]
    %v104 = vld [vmem:[#allocation2 + $0x188] sm:$0xff]
    %v105 = vld [vmem:[#allocation2 + $0x190] sm:$0xff]
    %v106 = vld [vmem:[#allocation2 + $0x198] sm:$0xff]
    %v107 = vld [vmem:[#allocation2 + $0x1a0] sm:$0xff]
    %v108 = vld [vmem:[#allocation2 + $0x1a8] sm:$0xff]
    %v109 = vld [vmem:[#allocation2 + $0x1b0] sm:$0xff]
    %v110 = vld [vmem:[#allocation2 + $0x1b8] sm:$0xff]
    %v111 = vld [vmem:[#allocation2 + $0x1c0] sm:$0xff]
    %v112 = vld [vmem:[#allocation2 + $0x1c8] sm:$0xff]
    %v113 = vld [vmem:[#allocation2 + $0x1d0] sm:$0xff]
    %v114 = vld [vmem:[#allocation2 + $0x1d8] sm:$0xff]
    %v115 = vld [vmem:[#allocation2 + $0x1e0] sm:$0xff]
    %v116 = vld [vmem:[#allocation2 + $0x1e8] sm:$0xff]
    %v117 = vld [vmem:[#allocation2 + $0x1f0] sm:$0xff]
    %v118 = vld [vmem:[#allocation2 + $0x1f8] sm:$0xff]
    %v119 = vld [vmem:[#allocation4] sm:$0xff]
    %v120 = vld [vmem:[#allocation4 + $0x8] sm:$0xff]
    %v121 = vld [vmem:[#allocation4 + $0x10] sm:$0xff]
    %v122 = vld [vmem:[#allocation4 + $0x18] sm:$0xff]
    %v123 = vld [vmem:[#allocation4 + $0x20] sm:$0xff]
    %v124 = vld [vmem:[#allocation4 + $0x28] sm:$0xff]
    %v125 = vld [vmem:[#allocation4 + $0x30] sm:$0xff]
    %v126 = vld [vmem:[#allocation4 + $0x38] sm:$0xff]
    %v127 = vld [vmem:[#allocation4 + $0x40] sm:$0xff]
    %v128 = vld [vmem:[#allocation4 + $0x48] sm:$0xff]
    %v129 = vld [vmem:[#allocation4 + $0x50] sm:$0xff]
    %v130 = vld [vmem:[#allocation4 + $0x58] sm:$0xff]
    %v131 = vld [vmem:[#allocation4 + $0x60] sm:$0xff]
    %v132 = vld [vmem:[#allocation4 + $0x68] sm:$0xff]
    %v133 = vld [vmem:[#allocation4 + $0x70] sm:$0xff]
    %v134 = vld [vmem:[#allocation4 + $0x78] sm:$0xff]
    %v135 = vld [vmem:[#allocation4 + $0x80] sm:$0xff]
    %v136 = vld [vmem:[#allocation4 + $0x88] sm:$0xff]
    %v137 = vld [vmem:[#allocation4 + $0x90] sm:$0xff]
    %v138 = vld [vmem:[#allocation4 + $0x98] sm:$0xff]
    %v139 = vld [vmem:[#allocation4 + $0xa0] sm:$0xff]
    %v140 = vld [vmem:[#allocation4 + $0xa8] sm:$0xff]
    %v141 = vld [vmem:[#allocation4 + $0xb0] sm:$0xff]
    %v142 = vld [vmem:[#allocation4 + $0xb8] sm:$0xff]
    %v143 = vld [vmem:[#allocation4 + $0xc0] sm:$0xff]
    %v144 = vld [vmem:[#allocation4 + $0xc8] sm:$0xff]
    %v145 = vld [vmem:[#allocation4 + $0xd0] sm:$0xff]
    %v146 = vld [vmem:[#allocation4 + $0xd8] sm:$0xff]
    %v147 = vld [vmem:[#allocation4 + $0xe0] sm:$0xff]
    %v148 = vld [vmem:[#allocation4 + $0xe8] sm:$0xff]
    %v149 = vld [vmem:[#allocation4 + $0xf0] sm:$0xff]
    %v150 = vld [vmem:[#allocation4 + $0xf8] sm:$0xff]
    %v151 = vld [vmem:[#allocation4 + $0x100] sm:$0xff]
    %v152 = vld [vmem:[#allocation4 + $0x108] sm:$0xff]
    %v153 = vld [vmem:[#allocation4 + $0x110] sm:$0xff]
    %v154 = vld [vmem:[#allocation4 + $0x118] sm:$0xff]
    %v155 = vld [vmem:[#allocation4 + $0x120] sm:$0xff]
    %v156 = vld [vmem:[#allocation4 + $0x128] sm:$0xff]
    %v157 = vld [vmem:[#allocation4 + $0x130] sm:$0xff]
    %v158 = vld [vmem:[#allocation4 + $0x138] sm:$0xff]
    %v159 = vld [vmem:[#allocation4 + $0x140] sm:$0xff]
    %v160 = vld [vmem:[#allocation4 + $0x148] sm:$0xff]
    %v161 = vld [vmem:[#allocation4 + $0x150] sm:$0xff]
    %v162 = vld [vmem:[#allocation4 + $0x158] sm:$0xff]
    %v163 = vld [vmem:[#allocation4 + $0x160] sm:$0xff]
    %v164 = vld [vmem:[#allocation4 + $0x168] sm:$0xff]
    %v165 = vld [vmem:[#allocation4 + $0x170] sm:$0xff]
    %v166 = vld [vmem:[#allocation4 + $0x178] sm:$0xff]
    %v167 = vld [vmem:[#allocation4 + $0x180] sm:$0xff]
    %v168 = vld [vmem:[#allocation4 + $0x188] sm:$0xff]
    %v169 = vld [vmem:[#allocation4 + $0x190] sm:$0xff]
    %v170 = vld [vmem:[#allocation4 + $0x198] sm:$0xff]
    %v171 = vld [vmem:[#allocation4 + $0x1a0] sm:$0xff]
    %v172 = vld [vmem:[#allocation4 + $0x1a8] sm:$0xff]
    %v173 = vld [vmem:[#allocation4 + $0x1b0] sm:$0xff]
    %v174 = vld [vmem:[#allocation4 + $0x1b8] sm:$0xff]
    %v175 = vld [vmem:[#allocation4 + $0x1c0] sm:$0xff]
    %v176 = vld [vmem:[#allocation4 + $0x1c8] sm:$0xff]
    %v177 = vld [vmem:[#allocation4 + $0x1d0] sm:$0xff]
    %v178 = vld [vmem:[#allocation4 + $0x1d8] sm:$0xff]
    %v179 = vld [vmem:[#allocation4 + $0x1e0] sm:$0xff]
    %v180 = vld [vmem:[#allocation4 + $0x1e8] sm:$0xff]
    %v181 = vld [vmem:[#allocation4 + $0x1f0] sm:$0xff]
    %v182 = vld [vmem:[#allocation4 + $0x1f8] sm:$0xff]
    %183 = vmatprep.subr.mxu0 %v56
    %184 = vmatpush1.msra.mxu0 %v55
    %185 = vmatprep.subr.mxu0 %v58
    %186 = vmatpush1.msra.mxu0 %v57
    %187 = vmatprep.subr.mxu0 %v60
    %188 = vmatpush1.msra.mxu0 %v59
    %189 = vmatprep.subr.mxu0 %v62
    %190 = vmatpush1.msra.mxu0 %v61
    %191 = vmatprep.subr.mxu0 %v64
    %192 = vmatpush1.msra.mxu0 %v63
    %193 = vmatprep.subr.mxu0 %v66
    %194 = vmatpush1.msra.mxu0 %v65
    %195 = vmatprep.subr.mxu0 %v68
    %196 = vmatpush1.msra.mxu0 %v67
    %197 = vmatprep.subr.mxu0 %v70
    %198 = vmatpush1.msra.mxu0 %v69
    %199 = vmatprep.subr.mxu0 %v72
    %200 = vmatpush1.msra.mxu0 %v71
    %201 = vmatprep.subr.mxu0 %v74
    %202 = vmatpush1.msra.mxu0 %v73
    %203 = vmatprep.subr.mxu0 %v76
    %204 = vmatpush1.msra.mxu0 %v75
    %205 = vmatprep.subr.mxu0 %v78
    %206 = vmatpush1.msra.mxu0 %v77
    %207 = vmatprep.subr.mxu0 %v80
    %208 = vmatpush1.msra.mxu0 %v79
    %209 = vmatprep.subr.mxu0 %v82
    %210 = vmatpush1.msra.mxu0 %v81
    %211 = vmatprep.subr.mxu0 %v84
    %212 = vmatpush1.msra.mxu0 %v83
    %213 = vmatprep.subr.mxu0 %v86
    %214 = vmatpush1.msra.mxu0 %v85
    %215 = vmatprep.subr.mxu0 %v88
    %216 = vmatpush1.msra.mxu0 %v87
    %217 = vmatprep.subr.mxu0 %v90
    %218 = vmatpush1.msra.mxu0 %v89
    %219 = vmatprep.subr.mxu0 %v92
    %220 = vmatpush1.msra.mxu0 %v91
    %221 = vmatprep.subr.mxu0 %v94
    %222 = vmatpush1.msra.mxu0 %v93
    %223 = vmatprep.subr.mxu0 %v96
    %224 = vmatpush1.msra.mxu0 %v95
    %225 = vmatprep.subr.mxu0 %v98
    %226 = vmatpush1.msra.mxu0 %v97
    %227 = vmatprep.subr.mxu0 %v100
    %228 = vmatpush1.msra.mxu0 %v99
    %229 = vmatprep.subr.mxu0 %v102
    %230 = vmatpush1.msra.mxu0 %v101
    %231 = vmatprep.subr.mxu0 %v104
    %232 = vmatpush1.msra.mxu0 %v103
    %233 = vmatprep.subr.mxu0 %v106
    %234 = vmatpush1.msra.mxu0 %v105
    %235 = vmatprep.subr.mxu0 %v108
    %236 = vmatpush1.msra.mxu0 %v107
    %237 = vmatprep.subr.mxu0 %v110
    %238 = vmatpush1.msra.mxu0 %v109
    %239 = vmatprep.subr.mxu0 %v112
    %240 = vmatpush1.msra.mxu0 %v111
    %241 = vmatprep.subr.mxu0 %v114
    %242 = vmatpush1.msra.mxu0 %v113
    %243 = vmatprep.subr.mxu0 %v116
    %244 = vmatpush1.msra.mxu0 %v115
    %245 = vmatprep.subr.mxu0 %v118
    %246 = vmatpush1.msra.mxu0 %v117
    %247 = vmatprep.mubr.f32.mxu0 %v54
    %248 = vmatmul.mubr.f32.gmra.mrb[0].mxu0 %v53
    %v249 = vpop.f32.mrb[0].mxu0
    %v250 = vadd.f32 0.0, %v249
    %v251 = vpop.f32.mrb[0].mxu0
    %v252 = vadd.f32 0.0, %v251
    %253 = vdwg.mxu0
    %v254 = vmax.f32 %v250, %v252
    %255 = vmax.xlane.f32.xlu0 %v254
    %v256 = vpop.xlane.xlu0 %255
    %257 = vmatprep.subr.mxu0 %v120
    %258 = vmatpush1.msra.mxu0 %v119
    %259 = vmatprep.subr.mxu0 %v122
    %260 = vmatpush1.msra.mxu0 %v121
    %261 = vmatprep.subr.mxu0 %v124
    %262 = vmatpush1.msra.mxu0 %v123
    %263 = vmatprep.subr.mxu0 %v126
    %264 = vmatpush1.msra.mxu0 %v125
    %265 = vmatprep.subr.mxu0 %v128
    %266 = vmatpush1.msra.mxu0 %v127
    %267 = vmatprep.subr.mxu0 %v130
    %268 = vmatpush1.msra.mxu0 %v129
    %269 = vmatprep.subr.mxu0 %v132
    %270 = vmatpush1.msra.mxu0 %v131
    %271 = vmatprep.subr.mxu0 %v134
    %272 = vmatpush1.msra.mxu0 %v133
    %273 = vmatprep.subr.mxu0 %v136
    %274 = vmatpush1.msra.mxu0 %v135
    %275 = vmatprep.subr.mxu0 %v138
    %276 = vmatpush1.msra.mxu0 %v137
    %277 = vmatprep.subr.mxu0 %v140
    %278 = vmatpush1.msra.mxu0 %v139
    %279 = vmatprep.subr.mxu0 %v142
    %280 = vmatpush1.msra.mxu0 %v141
    %281 = vmatprep.subr.mxu0 %v144
    %282 = vmatpush1.msra.mxu0 %v143
    %283 = vmatprep.subr.mxu0 %v146
    %284 = vmatpush1.msra.mxu0 %v145
    %285 = vmatprep.subr.mxu0 %v148
    %286 = vmatpush1.msra.mxu0 %v147
    %287 = vmatprep.subr.mxu0 %v150
    %288 = vmatpush1.msra.mxu0 %v149
    %289 = vmatprep.subr.mxu0 %v152
    %290 = vmatpush1.msra.mxu0 %v151
    %291 = vmatprep.subr.mxu0 %v154
    %292 = vmatpush1.msra.mxu0 %v153
    %293 = vmatprep.subr.mxu0 %v156
    %294 = vmatpush1.msra.mxu0 %v155
    %295 = vmatprep.subr.mxu0 %v158
    %296 = vmatpush1.msra.mxu0 %v157
    %297 = vmatprep.subr.mxu0 %v160
    %298 = vmatpush1.msra.mxu0 %v159
    %299 = vmatprep.subr.mxu0 %v162
    %300 = vmatpush1.msra.mxu0 %v161
    %301 = vmatprep.subr.mxu0 %v164
    %302 = vmatpush1.msra.mxu0 %v163
    %303 = vmatprep.subr.mxu0 %v166
    %304 = vmatpush1.msra.mxu0 %v165
    %305 = vmatprep.subr.mxu0 %v168
    %306 = vmatpush1.msra.mxu0 %v167
    %307 = vmatprep.subr.mxu0 %v170
    %308 = vmatpush1.msra.mxu0 %v169
    %309 = vmatprep.subr.mxu0 %v172
    %310 = vmatpush1.msra.mxu0 %v171
    %311 = vmatprep.subr.mxu0 %v174
    %312 = vmatpush1.msra.mxu0 %v173
    %313 = vmatprep.subr.mxu0 %v176
    %314 = vmatpush1.msra.mxu0 %v175
    %315 = vmatprep.subr.mxu0 %v178
    %316 = vmatpush1.msra.mxu0 %v177
    %317 = vmatprep.subr.mxu0 %v180
    %318 = vmatpush1.msra.mxu0 %v179
    %319 = vmatprep.subr.mxu0 %v182
    %320 = vmatpush1.msra.mxu0 %v181
    %321 = vmatprep.mubr.f32.mxu0 %v54
    %322 = vmatmul.mubr.f32.gmra.mrb[0].mxu0 %v53
    %v323 = vpop.f32.mrb[0].mxu0
    %v324 = vadd.f32 0.0, %v323
    %v325 = vpop.f32.mrb[0].mxu0
    %v326 = vadd.f32 0.0, %v325
    %327 = vdwg.mxu0
    %v328 = vmul.f32 %v53, 2.0
    %v329 = vmul.f32 %v54, 2.0
    %v330 = vsub.f32 %v328, %v324
    %v331 = vsub.f32 %v329, %v326
    %v332 = vrot.slane %v53, 7
    %v333 = vrot.slane %v54, 7
    %v334 = vadd.f32 %v53, %v332
    %v335 = vadd.f32 %v54, %v333
    %v336 = vrot.slane %v330, 7
    %v337 = vrot.slane %v331, 7
    %v338 = vadd.f32 %v330, %v336
    %v339 = vadd.f32 %v331, %v337
    %v340 = vrot.slane %v53, 6
    %v341 = vrot.slane %v54, 6
    %v342 = vadd.f32 %v334, %v340
    %v343 = vadd.f32 %v335, %v341
    %v344 = vrot.slane %v330, 6
    %v345 = vrot.slane %v331, 6
    %v346 = vadd.f32 %v338, %v344
    %v347 = vadd.f32 %v339, %v345
    %v348 = vrot.slane %v53, 5
    %v349 = vrot.slane %v54, 5
    %v350 = vadd.f32 %v342, %v348
    %v351 = vadd.f32 %v343, %v349
    %v352 = vrot.slane %v330, 5
    %v353 = vrot.slane %v331, 5
    %v354 = vadd.f32 %v346, %v352
    %v355 = vadd.f32 %v347, %v353
    %v356 = vmax.f32 %v350, %v351
    %357 = vmax.xlane.f32.xlu0 %v356
    %v358 = vpop.xlane.xlu0 %357
    %v359 = vmax.f32 %v354, %v355
    %360 = vmax.xlane.f32.xlu0 %v359
    %v361 = vpop.xlane.xlu0 %360
    %vm362 = vcmask 7168
    %v363 = vsel %vm362, %v256, %v358
    %vm364 = vcmask 15360
    %v365 = vsel %vm364, %v363, %v361
    %vm366 = vcmask 23552
    %367 = vst.msk [vmem:[%s3] sm:$0xff] %vm366, %v365
    // Predicated region
    $region26: #{tpu_custom_call.1} parent=1 // pred_check
      _
    $region27: #{tpu_custom_call.1} parent=1 // pred_check_branch
      %369 = sbr.rel (0) target = $region29
    $region28: #{tpu_custom_call.1} parent=1 // pred_region
      _
    $region29: #{tpu_custom_call.1} parent=1 // pred_fallthru
      _
    // Predicated region
    $region30: #{tpu_custom_call.1} parent=1 // pred_check
      _
    $region31: #{tpu_custom_call.1} parent=1 // pred_check_branch
      %371 = sbr.rel (0) target = $region33
    $region32: #{tpu_custom_call.1} parent=1 // pred_region
      _
    $region33: #{tpu_custom_call.1} parent=1 // pred_fallthru
      _
    %372 = vsyncpa [#allocation3], 1
    %373 = vsyncpa [#allocation5], 1

</llo_original>
